<compile_context>
chip_gen: v5e
topology: v5e:2x2
jax: 0.10.0
libtpu: 0.0.40
codegen_flags: <defaults>
</compile_context>

<pallas_src>
import functools

import jax
import jax.numpy as jnp
from jax.experimental import pallas as pl
from jax.experimental.pallas import tpu as pltpu


# ----------------------------------------------------------------------------
# Fused kernel: partial spatial sum -> (on last chunk) mean, fc1, relu, fc2,
# sigmoid.
# ----------------------------------------------------------------------------
def _sew_kernel(x_ref, w1_ref, b1_ref, w2_ref, b2_ref, o_ref, acc_ref, *, inv_hw):
    s = pl.program_id(1)

    @pl.when(s == 0)
    def _():
        acc_ref[...] = jnp.zeros_like(acc_ref)

    # Partial spatial sum of this chunk: (ts, C) -> (1, C), accumulate in f32.
    chunk = x_ref[0].astype(jnp.float32)
    acc_ref[...] += jnp.sum(chunk, axis=0, keepdims=True)

    @pl.when(s == pl.num_programs(1) - 1)
    def _():
        avg = acc_ref[...] * inv_hw                               # (1, C)
        # fc1: (1,C) @ (C,Cr) as VPU broadcast-mul + sublane reduce (tiny op,
        # keeps the MXU off the critical path for a ~1% utilization matmul).
        h = jnp.sum(avg[:, :, None] * w1_ref[...][None, :, :], axis=1)
        h = jnp.maximum(h + b1_ref[...], 0.0)                     # (1, Cr)
        # fc2: (1,Cr) @ (Cr,C)
        y = jnp.sum(h[:, :, None] * w2_ref[...][None, :, :], axis=1)
        y = y + b2_ref[...]                                       # (1, C)
        o_ref[0] = jax.nn.sigmoid(y).astype(o_ref.dtype)


# ----------------------------------------------------------------------------
# Wrapper: NCHW in / (B, C, 1, 1) out, matching the PyTorch module.
# ----------------------------------------------------------------------------
def sew_forward(x_nchw, w1, b1, w2, b2, *, spatial_tile=1024):
    """SEWModule forward.

    x_nchw : (B, C, H, W)   any float dtype (f32 or bf16); accumulation is f32
    w1     : (C, Cr)        fc1 weight (PyTorch conv1x1 weight (Cr,C,1,1).T)
    b1     : (Cr,)
    w2     : (Cr, C)        fc2 weight
    b2     : (C,)
    returns: (B, C, 1, 1)   float32 sigmoid gate
    """
    B, C, H, W = x_nchw.shape
    Cr = w1.shape[1]
    M = H * W

    # NHWC, flatten spatial -> (B, M, C): channels on lanes.
    x = jnp.transpose(x_nchw, (0, 2, 3, 1)).reshape(B, M, C)

    # Spatial chunk size: multiple of 8 sublanes, capped for VMEM residency.
    ts = min(spatial_tile, M)
    ts = max(8, ((ts + 7) // 8) * 8)
    S = pl.cdiv(M, ts)
    Mp = S * ts
    if Mp != M:
        # Zero padding does not change the spatial sum; mean uses true H*W.
        x = jnp.pad(x, ((0, 0), (0, Mp - M), (0, 0)))

    kernel = functools.partial(_sew_kernel, inv_hw=1.0 / float(M))
    const2 = lambda b, s: (0, 0)

    out = pl.pallas_call(
        kernel,
        out_shape=jax.ShapeDtypeStruct((B, 1, C), jnp.float32),
        grid_spec=pltpu.PrefetchScalarGridSpec(
            num_scalar_prefetch=0,
            grid=(B, S),
            in_specs=[
                pl.BlockSpec((1, ts, C), lambda b, s: (b, s, 0)),   # activations
                pl.BlockSpec((C, Cr), const2),                      # w1
                pl.BlockSpec((1, Cr), const2),                      # b1
                pl.BlockSpec((Cr, C), const2),                      # w2
                pl.BlockSpec((1, C), const2),                       # b2
            ],
            out_specs=pl.BlockSpec((1, 1, C), lambda b, s: (b, 0, 0)),
            scratch_shapes=[pltpu.VMEM((1, C), jnp.float32)],       # spatial-sum acc
        ),
        compiler_params=pltpu.CompilerParams(
            dimension_semantics=("parallel", "arbitrary"),
        ),
    )(x, w1, b1.reshape(1, Cr), w2, b2.reshape(1, C))

    return out.reshape(B, C, 1, 1)


# ----------------------------------------------------------------------------
# Pure-JAX reference (for correctness check).
# ----------------------------------------------------------------------------
def sew_reference(x_nchw, w1, b1, w2, b2):
    avg = jnp.mean(x_nchw.astype(jnp.float32), axis=(2, 3))        # (B, C)
    h = jnp.maximum(avg @ w1 + b1, 0.0)
    y = jax.nn.sigmoid(h @ w2 + b2)
    return y.reshape(y.shape[0], y.shape[1], 1, 1)


# ----------------------------------------------------------------------------
if __name__ == "__main__":
    key = jax.random.PRNGKey(0)

    def make_case(key, B, C, H, W, reduction):
        Cr = max(1, C // reduction)
        kx, k1, k2, k3, k4 = jax.random.split(key, 5)
        x = jax.random.normal(kx, (B, C, H, W), jnp.float32)
        w1 = jax.random.normal(k1, (C, Cr), jnp.float32) * 0.1
        b1 = jax.random.normal(k2, (Cr,), jnp.float32) * 0.1
        w2 = jax.random.normal(k3, (Cr, C), jnp.float32) * 0.1
        b2 = jax.random.normal(k4, (C,), jnp.float32) * 0.1
        return x, w1, b1, w2, b2

    k1, k2 = jax.random.split(key)

    # Case 1: single spatial chunk (S=1), channels=64, reduction=16.
    x, w1, b1, w2, b2 = make_case(k1, B=2, C=64, H=16, W=16, reduction=16)
    out = jax.block_until_ready(sew_forward(x, w1, b1, w2, b2))
    ref = sew_reference(x, w1, b1, w2, b2)
    assert out.shape == (2, 64, 1, 1)
    assert bool(jnp.all(jnp.isfinite(out)))
    assert bool(jnp.allclose(out, ref, atol=2e-5, rtol=2e-5)), \
        float(jnp.max(jnp.abs(out - ref)))

    # Case 2: odd spatial size -> exercises spatial chunking + zero padding.
    x, w1, b1, w2, b2 = make_case(k2, B=2, C=32, H=9, W=9, reduction=16)
    out = jax.block_until_ready(sew_forward(x, w1, b1, w2, b2, spatial_tile=24))
    ref = sew_reference(x, w1, b1, w2, b2)
    assert out.shape == (2, 32, 1, 1)
    assert bool(jnp.all(jnp.isfinite(out)))
    assert bool(jnp.allclose(out, ref, atol=2e-5, rtol=2e-5)), \
        float(jnp.max(jnp.abs(out - ref)))

    print("KERNEL_OK")
</pallas_src>

<mosaic_0001>
module attributes {stable_mosaic.version = 11 : i64} {
  func.func @_sew_kernel(%arg0: i32, %arg1: i32, %arg2: memref<1x256x64xf32, #tpu.memory_space<vmem>>, %arg3: memref<64x4xf32, #tpu.memory_space<vmem>>, %arg4: memref<1x4xf32, #tpu.memory_space<vmem>>, %arg5: memref<4x64xf32, #tpu.memory_space<vmem>>, %arg6: memref<1x64xf32, #tpu.memory_space<vmem>>, %arg7: memref<1x1x64xf32, #tpu.memory_space<vmem>>, %arg8: memref<1x64xf32, #tpu.memory_space<vmem>>) attributes {dimension_semantics = [#tpu.dimension_semantics<parallel>, #tpu.dimension_semantics<arbitrary>], iteration_bounds = array<i64: 2, 1>, scalar_prefetch = 0 : i64, scratch_operands = 1 : i64, tpu.core_type = #tpu.core_type<tc>, window_params = [{transform_indices = @transform_0, window_bounds = array<i64: 1, 256, 64>}, {pipeline_mode = #tpu.pipeline_mode<synchronous>, transform_indices = @transform_1, window_bounds = array<i64: 64, 4>}, {pipeline_mode = #tpu.pipeline_mode<synchronous>, transform_indices = @transform_2, window_bounds = array<i64: 1, 4>}, {pipeline_mode = #tpu.pipeline_mode<synchronous>, transform_indices = @transform_3, window_bounds = array<i64: 4, 64>}, {pipeline_mode = #tpu.pipeline_mode<synchronous>, transform_indices = @transform_4, window_bounds = array<i64: 1, 64>}, {transform_indices = @transform_5, window_bounds = array<i64: 1, 1, 64>}]} {
    %c0_i32 = arith.constant 0 : i32
    %0 = arith.cmpi eq, %arg1, %c0_i32 : i32
    %1 = arith.extui %0 : i1 to i32
    %c0_i32_0 = arith.constant 0 : i32
    %2 = arith.cmpi ne, %1, %c0_i32_0 : i32
    scf.if %2 {
      %cst_9 = arith.constant 0.000000e+00 : f32
      %13 = vector.broadcast %cst_9 : f32 to vector<1x64xf32>
      %c0_10 = arith.constant 0 : index
      %c0_11 = arith.constant 0 : index
      %14 = vector.load %arg8[%c0_10, %c0_11] : memref<1x64xf32, #tpu.memory_space<vmem>>, vector<1x64xf32>
      tpu.vector_store %arg8[%c0_10, %c0_11], %13 {strides = array<i32>} : memref<1x64xf32, #tpu.memory_space<vmem>>, vector<1x64xf32>,
    } else {
    }
    %c0 = arith.constant 0 : index
    %c0_1 = arith.constant 0 : index
    %c0_2 = arith.constant 0 : index
    %3 = vector.load %arg2[%c0, %c0_1, %c0_2] : memref<1x256x64xf32, #tpu.memory_space<vmem>>, vector<1x256x64xf32>
    %4 = vector.shape_cast %3 : vector<1x256x64xf32> to vector<256x64xf32>
    %c0_3 = arith.constant 0 : index
    %c0_4 = arith.constant 0 : index
    %5 = vector.load %arg8[%c0_3, %c0_4] : memref<1x64xf32, #tpu.memory_space<vmem>>, vector<1x64xf32>
    %cst = arith.constant dense<0.000000e+00> : vector<64xf32>
    %6 = vector.multi_reduction <add>, %4, %cst [0] : vector<256x64xf32> to vector<64xf32>
    %7 = vector.shape_cast %6 : vector<64xf32> to vector<1x64xf32>
    %8 = arith.addf %5, %7 : vector<1x64xf32>
    %c0_5 = arith.constant 0 : index
    %c0_6 = arith.constant 0 : index
    %9 = vector.load %arg8[%c0_5, %c0_6] : memref<1x64xf32, #tpu.memory_space<vmem>>, vector<1x64xf32>
    tpu.vector_store %arg8[%c0_5, %c0_6], %8 {strides = array<i32>} : memref<1x64xf32, #tpu.memory_space<vmem>>, vector<1x64xf32>,
    %c0_i32_7 = arith.constant 0 : i32
    %10 = arith.cmpi eq, %arg1, %c0_i32_7 : i32
    %11 = arith.extui %10 : i1 to i32
    %c0_i32_8 = arith.constant 0 : i32
    %12 = arith.cmpi ne, %11, %c0_i32_8 : i32
    scf.if %12 {
      %c0_9 = arith.constant 0 : index
      %c0_10 = arith.constant 0 : index
      %13 = vector.load %arg8[%c0_9, %c0_10] : memref<1x64xf32, #tpu.memory_space<vmem>>, vector<1x64xf32>
      %cst_11 = arith.constant 3.906250e-03 : f32
      %14 = vector.broadcast %cst_11 : f32 to vector<1x64xf32>
      %15 = arith.mulf %13, %14 : vector<1x64xf32>
      %16 = vector.shape_cast %15 : vector<1x64xf32> to vector<1x64x1xf32>
      %c0_12 = arith.constant 0 : index
      %c0_13 = arith.constant 0 : index
      %17 = vector.load %arg3[%c0_12, %c0_13] : memref<64x4xf32, #tpu.memory_space<vmem>>, vector<64x4xf32>
      %18 = vector.shape_cast %17 : vector<64x4xf32> to vector<1x64x4xf32>
      %19 = vector.broadcast %16 : vector<1x64x1xf32> to vector<1x64x4xf32>
      %20 = arith.mulf %19, %18 : vector<1x64x4xf32>
      %cst_14 = arith.constant dense<0.000000e+00> : vector<1x4xf32>
      %21 = vector.multi_reduction <add>, %20, %cst_14 [1] : vector<1x64x4xf32> to vector<1x4xf32>
      %c0_15 = arith.constant 0 : index
      %c0_16 = arith.constant 0 : index
      %22 = vector.load %arg4[%c0_15, %c0_16] : memref<1x4xf32, #tpu.memory_space<vmem>>, vector<1x4xf32>
      %23 = arith.addf %21, %22 : vector<1x4xf32>
      %cst_17 = arith.constant 0.000000e+00 : f32
      %24 = vector.broadcast %cst_17 : f32 to vector<1x4xf32>
      %25 = arith.maximumf %23, %24 : vector<1x4xf32>
      %26 = vector.shape_cast %25 : vector<1x4xf32> to vector<1x4x1xf32>
      %c0_18 = arith.constant 0 : index
      %c0_19 = arith.constant 0 : index
      %27 = vector.load %arg5[%c0_18, %c0_19] : memref<4x64xf32, #tpu.memory_space<vmem>>, vector<4x64xf32>
      %28 = vector.shape_cast %27 : vector<4x64xf32> to vector<1x4x64xf32>
      %29 = vector.broadcast %26 : vector<1x4x1xf32> to vector<1x4x64xf32>
      %30 = arith.mulf %29, %28 : vector<1x4x64xf32>
      %cst_20 = arith.constant dense<0.000000e+00> : vector<1x64xf32>
      %31 = vector.multi_reduction <add>, %30, %cst_20 [1] : vector<1x4x64xf32> to vector<1x64xf32>
      %c0_21 = arith.constant 0 : index
      %c0_22 = arith.constant 0 : index
      %32 = vector.load %arg6[%c0_21, %c0_22] : memref<1x64xf32, #tpu.memory_space<vmem>>, vector<1x64xf32>
      %33 = arith.addf %31, %32 : vector<1x64xf32>
      %34 = arith.negf %33 : vector<1x64xf32>
      %35 = math.exp %34 : vector<1x64xf32>
      %cst_23 = arith.constant 1.000000e+00 : f32
      %36 = vector.broadcast %cst_23 : f32 to vector<1x64xf32>
      %37 = arith.addf %36, %35 : vector<1x64xf32>
      %38 = arith.divf %36, %37 : vector<1x64xf32>
      %c0_24 = arith.constant 0 : index
      %c0_25 = arith.constant 0 : index
      %c0_26 = arith.constant 0 : index
      %39 = vector.load %arg7[%c0_24, %c0_25, %c0_26] : memref<1x1x64xf32, #tpu.memory_space<vmem>>, vector<1x1x64xf32>
      %40 = vector.shape_cast %39 : vector<1x1x64xf32> to vector<1x64xf32>
      %41 = vector.shape_cast %38 : vector<1x64xf32> to vector<1x1x64xf32>
      tpu.vector_store %arg7[%c0_24, %c0_25, %c0_26], %41 {strides = array<i32>} : memref<1x1x64xf32, #tpu.memory_space<vmem>>, vector<1x1x64xf32>,
    } else {
    }
    return
  }
  func.func @transform_0(%arg0: i32, %arg1: i32) -> (i32, i32, i32) {
    %c0_i32 = arith.constant 0 : i32
    %c0_i32_0 = arith.constant 0 : i32
    return %arg0, %arg1, %c0_i32 : i32, i32, i32
  }
  func.func @transform_1(%arg0: i32, %arg1: i32) -> (i32, i32) {
    %c0_i32 = arith.constant 0 : i32
    %c0_i32_0 = arith.constant 0 : i32
    %c0_i32_1 = arith.constant 0 : i32
    return %c0_i32, %c0_i32_0 : i32, i32
  }
  func.func @transform_2(%arg0: i32, %arg1: i32) -> (i32, i32) {
    %c0_i32 = arith.constant 0 : i32
    %c0_i32_0 = arith.constant 0 : i32
    %c0_i32_1 = arith.constant 0 : i32
    return %c0_i32, %c0_i32_0 : i32, i32
  }
  func.func @transform_3(%arg0: i32, %arg1: i32) -> (i32, i32) {
    %c0_i32 = arith.constant 0 : i32
    %c0_i32_0 = arith.constant 0 : i32
    %c0_i32_1 = arith.constant 0 : i32
    return %c0_i32, %c0_i32_0 : i32, i32
  }
  func.func @transform_4(%arg0: i32, %arg1: i32) -> (i32, i32) {
    %c0_i32 = arith.constant 0 : i32
    %c0_i32_0 = arith.constant 0 : i32
    %c0_i32_1 = arith.constant 0 : i32
    return %c0_i32, %c0_i32_0 : i32, i32
  }
  func.func @transform_5(%arg0: i32, %arg1: i32) -> (i32, i32, i32) {
    %c0_i32 = arith.constant 0 : i32
    %c0_i32_0 = arith.constant 0 : i32
    %c0_i32_1 = arith.constant 0 : i32
    return %arg0, %c0_i32, %c0_i32_0 : i32, i32, i32
  }
}

</mosaic_0001>

<llo_original>
// kernel: tpu_custom_call.1
$region0: #{tpu_custom_call.1}
  #allocation0 [shape = 'u32[]', space=smem, size = 0x4, offset = 0x4, fixed_abs, tag = 'smem constant byte address 0x4 - core index']
  #allocation1 [shape = 'u32[72,128]{1,0:T(1,128)}', space=vmem, size = 0x9000, scoped, tag = 'internal scratch']
  #allocation2 [shape = 'f32[1,64]{1,0:T(1,128)}', space=vmem, size = 0x200, scoped, tag = 'scratch operand']
  %s0 = inlined_call_operand.vmem [shape: f32[2,256,64], index: 0, kind: input, shape index: {}]
  %s1 = inlined_call_operand.vmem [shape: f32[64,4], index: 1, kind: input, shape index: {}]
  %s2 = inlined_call_operand.vmem [shape: f32[1,4], index: 2, kind: input, shape index: {}]
  %s3 = inlined_call_operand.vmem [shape: f32[4,64], index: 3, kind: input, shape index: {}]
  %s4 = inlined_call_operand.vmem [shape: f32[1,64], index: 4, kind: input, shape index: {}]
  %s5 = inlined_call_operand.hbm [shape: f32[2,1,64], index: 5, kind: output, shape index: {}]
  %s6 = sld [smem:[#allocation0]]
  $region61: #{tpu_custom_call.1} parent=0
    _
  %s8 = ssub.s32 1, %s6
  %s9 = scalar_select 0, %s8, %s6
  $region1: #{tpu_custom_call.1} parent=0
    #allocation3 [shape = 'u8[1024]{0}', space=vmem, size = 0x400, scoped, tag = 'output window, operand 0']
    #allocation4 [shape = 's32[2]{0}', space=sflag, size = 0x8, scoped, tag = 'scoped memory for tpu_custom_call.1']
    %10 = vsyncpa [#allocation4], 0
    %s11 = scalar_lea.sflag [#allocation4], 1
    %12 = vsyncpa %s11, 0
    loop: start=0, step=1, limit=4
    $region2: #{tpu_custom_call.1} parent=1 // loop_pre_header
      _
    $region3: #{tpu_custom_call.1} parent=1 // loop_header
      %s14 = sphi 0, %s18
      %p15 = scmp.ge.s32.totalorder %s14, 4
      %s21 = sphi 0, %s33
      %s22 = sphi 0, %s29
      %s23 = sphi 0, %s21
      %s24 = sphi 0, %s22
      %s25 = sphi 0, %s23
      %s26 = sphi 0, %s24
      %s38 = sphi 0, %s40
      %s41 = sphi 0, %s38
      %s42 = sphi 0, %s41
      %s58 = sphi 0, %s42
      %s62 = sphi 0, %s62
      %s64 = sphi 0, %s62
      %s65 = sphi 0, %s64
      %s79 = sphi 0, %s65
      %s83 = sphi 0, %s83
      %s85 = sphi 0, %s83
      %s86 = sphi 0, %s85
      %s100 = sphi 0, %s86
      %s104 = sphi 0, %s104
      %s106 = sphi 0, %s104
      %s107 = sphi 0, %s106
      %s121 = sphi 0, %s107
      %s125 = sphi 0, %s125
      %s127 = sphi 0, %s125
      %s128 = sphi 0, %s127
      %s142 = sphi 0, %s128
      %s148 = sphi 0, %s150
      %s151 = sphi 0, %s148
      %s152 = sphi 0, %s151
      %s168 = sphi 0, %s152
    $region4: #{tpu_custom_call.1} parent=1 // loop_header_branch
      %17 = sbr.rel (%p15) target = $region8
    $region5: #{tpu_custom_call.1} parent=1 // loop_body
      %s19 = ssub.s32 %s14, 1
      %s20 = ssub.s32 %s14, 2
      %s27 = sadd.s32 1, %s22
      %p28 = scmp.ge.s32.totalorder %s27, 1
      %s29 = scalar_select %p28, 0, %s27
      %s30 = sadd.s32 1, %s21
      %s31 = scalar_select %p28, %s30, %s21
      %p32 = scmp.ge.s32.totalorder %s31, 2
      %s33 = scalar_select %p32, 0, %s31
      %s34 = ssub.s32 %s21, %s33
      %s35 = ssub.s32 %s22, %s29
      %s36 = sor.u32 %s34, %s35
      %p37 = scmp.eq.s32.totalorder %s36, 0
      %s39 = sadd.s32 %s38, 1
      %s40 = scalar_select %p37, %s38, %s39
      %p43 = pneg %p37
      %p44 = scmp.eq.s32.totalorder %s14, 1
      %p45 = por %p43, %p44
      %p46 = scmp.ne.s32.totalorder %s38, %s41
      %p47 = scmp.eq.s32.totalorder %s14, 0
      %p48 = por %p46, %p47
      %p49 = scmp.ne.s32.totalorder %s38, %s41
      %p50 = scmp.eq.s32.totalorder %s19, 1
      %p51 = por %p49, %p50
      %p52 = scmp.ne.s32.totalorder %s41, %s42
      %p53 = scmp.eq.s32.totalorder %s19, 0
      %p54 = por %p52, %p53
      %p55 = scmp.ne.s32.totalorder %s41, %s42
      %p56 = scmp.eq.s32.totalorder %s20, 1
      %p57 = por %p55, %p56
      %p59 = scmp.ne.s32.totalorder %s42, %s58
      %p60 = scmp.eq.s32.totalorder %s20, 0
      %p61 = por %p59, %p60
      %s63 = sadd.s32 %s62, 1
      %p66 = scmp.eq.s32.totalorder %s14, 1
      %p67 = scmp.ne.s32.totalorder %s62, %s64
      %p68 = scmp.eq.s32.totalorder %s14, 0
      %p69 = por %p67, %p68
      %p70 = scmp.ne.s32.totalorder %s62, %s64
      %p71 = scmp.eq.s32.totalorder %s19, 1
      %p72 = por %p70, %p71
      %p73 = scmp.ne.s32.totalorder %s64, %s65
      %p74 = scmp.eq.s32.totalorder %s19, 0
      %p75 = por %p73, %p74
      %p76 = scmp.ne.s32.totalorder %s64, %s65
      %p77 = scmp.eq.s32.totalorder %s20, 1
      %p78 = por %p76, %p77
      %p80 = scmp.ne.s32.totalorder %s65, %s79
      %p81 = scmp.eq.s32.totalorder %s20, 0
      %p82 = por %p80, %p81
      %s84 = sadd.s32 %s83, 1
      %p87 = scmp.eq.s32.totalorder %s14, 1
      %p88 = scmp.ne.s32.totalorder %s83, %s85
      %p89 = scmp.eq.s32.totalorder %s14, 0
      %p90 = por %p88, %p89
      %p91 = scmp.ne.s32.totalorder %s83, %s85
      %p92 = scmp.eq.s32.totalorder %s19, 1
      %p93 = por %p91, %p92
      %p94 = scmp.ne.s32.totalorder %s85, %s86
      %p95 = scmp.eq.s32.totalorder %s19, 0
      %p96 = por %p94, %p95
      %p97 = scmp.ne.s32.totalorder %s85, %s86
      %p98 = scmp.eq.s32.totalorder %s20, 1
      %p99 = por %p97, %p98
      %p101 = scmp.ne.s32.totalorder %s86, %s100
      %p102 = scmp.eq.s32.totalorder %s20, 0
      %p103 = por %p101, %p102
      %s105 = sadd.s32 %s104, 1
      %p108 = scmp.eq.s32.totalorder %s14, 1
      %p109 = scmp.ne.s32.totalorder %s104, %s106
      %p110 = scmp.eq.s32.totalorder %s14, 0
      %p111 = por %p109, %p110
      %p112 = scmp.ne.s32.totalorder %s104, %s106
      %p113 = scmp.eq.s32.totalorder %s19, 1
      %p114 = por %p112, %p113
      %p115 = scmp.ne.s32.totalorder %s106, %s107
      %p116 = scmp.eq.s32.totalorder %s19, 0
      %p117 = por %p115, %p116
      %p118 = scmp.ne.s32.totalorder %s106, %s107
      %p119 = scmp.eq.s32.totalorder %s20, 1
      %p120 = por %p118, %p119
      %p122 = scmp.ne.s32.totalorder %s107, %s121
      %p123 = scmp.eq.s32.totalorder %s20, 0
      %p124 = por %p122, %p123
      %s126 = sadd.s32 %s125, 1
      %p129 = scmp.eq.s32.totalorder %s14, 1
      %p130 = scmp.ne.s32.totalorder %s125, %s127
      %p131 = scmp.eq.s32.totalorder %s14, 0
      %p132 = por %p130, %p131
      %p133 = scmp.ne.s32.totalorder %s125, %s127
      %p134 = scmp.eq.s32.totalorder %s19, 1
      %p135 = por %p133, %p134
      %p136 = scmp.ne.s32.totalorder %s127, %s128
      %p137 = scmp.eq.s32.totalorder %s19, 0
      %p138 = por %p136, %p137
      %p139 = scmp.ne.s32.totalorder %s127, %s128
      %p140 = scmp.eq.s32.totalorder %s20, 1
      %p141 = por %p139, %p140
      %p143 = scmp.ne.s32.totalorder %s128, %s142
      %p144 = scmp.eq.s32.totalorder %s20, 0
      %p145 = por %p143, %p144
      %s146 = ssub.s32 %s21, %s33
      %p147 = scmp.eq.s32.totalorder %s146, 0
      %s149 = sadd.s32 %s148, 1
      %s150 = scalar_select %p147, %s148, %s149
      %p153 = pneg %p147
      %p154 = scmp.eq.s32.totalorder %s14, 1
      %p155 = por %p153, %p154
      %p156 = scmp.ne.s32.totalorder %s148, %s151
      %p157 = scmp.eq.s32.totalorder %s14, 0
      %p158 = por %p156, %p157
      %p159 = scmp.ne.s32.totalorder %s148, %s151
      %p160 = scmp.eq.s32.totalorder %s19, 1
      %p161 = por %p159, %p160
      %p162 = scmp.ne.s32.totalorder %s151, %s152
      %p163 = scmp.eq.s32.totalorder %s19, 0
      %p164 = por %p162, %p163
      %p165 = scmp.ne.s32.totalorder %s151, %s152
      %p166 = scmp.eq.s32.totalorder %s20, 1
      %p167 = por %p165, %p166
      %p169 = scmp.ne.s32.totalorder %s152, %s168
      %p170 = scmp.eq.s32.totalorder %s20, 0
      %p171 = por %p169, %p170
      %p172 = scmp.le.s32.totalorder 1, %s14
      %p173 = scmp.lt.s32.totalorder %s14, 3
      %p174 = pnand %p172, %p173
      %p175 = pneg %p174
      // Predicated region
      $region9: #{tpu_custom_call.1} parent=5 // pred_check
        _
      $region10: #{tpu_custom_call.1} parent=5 // pred_check_branch
        %177 = sbr.rel (%p174) target = $region12
      $region11: #{tpu_custom_call.1} parent=5 // pred_region
        %s178 = ssub.s32 %s14, 1
        // Predicated region
        $region13: #{tpu_custom_call.1} parent=11 // pred_check
          %p179 = pneg %p75
        $region14: #{tpu_custom_call.1} parent=11 // pred_check_branch
          %181 = sbr.rel (%p179) target = $region16
        $region15: #{tpu_custom_call.1} parent=11 // pred_region
          _
        $region16: #{tpu_custom_call.1} parent=11 // pred_fallthru
          _
        // Predicated region
        $region17: #{tpu_custom_call.1} parent=11 // pred_check
          %p182 = pneg %p96
        $region18: #{tpu_custom_call.1} parent=11 // pred_check_branch
          %184 = sbr.rel (%p182) target = $region20
        $region19: #{tpu_custom_call.1} parent=11 // pred_region
          _
        $region20: #{tpu_custom_call.1} parent=11 // pred_fallthru
          _
        // Predicated region
        $region21: #{tpu_custom_call.1} parent=11 // pred_check
          %p185 = pneg %p117
        $region22: #{tpu_custom_call.1} parent=11 // pred_check_branch
          %187 = sbr.rel (%p185) target = $region24
        $region23: #{tpu_custom_call.1} parent=11 // pred_region
          _
        $region24: #{tpu_custom_call.1} parent=11 // pred_fallthru
          _
        // Predicated region
        $region25: #{tpu_custom_call.1} parent=11 // pred_check
          %p188 = pneg %p138
        $region26: #{tpu_custom_call.1} parent=11 // pred_check_branch
          %190 = sbr.rel (%p188) target = $region28
        $region27: #{tpu_custom_call.1} parent=11 // pred_region
          _
        $region28: #{tpu_custom_call.1} parent=11 // pred_fallthru
          _
      $region12: #{tpu_custom_call.1} parent=5 // pred_fallthru
        _
      %p191 = scmp.lt.s32.totalorder %s14, 2
      // Predicated region
      $region29: #{tpu_custom_call.1} parent=5 // pred_check
        %p192 = pneg %p191
      $region30: #{tpu_custom_call.1} parent=5 // pred_check_branch
        %194 = sbr.rel (%p192) target = $region32
      $region31: #{tpu_custom_call.1} parent=5 // pred_region
        // Predicated region
        $region33: #{tpu_custom_call.1} parent=31 // pred_check
          %p195 = pneg %p48
        $region34: #{tpu_custom_call.1} parent=31 // pred_check_branch
          %197 = sbr.rel (%p195) target = $region36
        $region35: #{tpu_custom_call.1} parent=31 // pred_region
          %s198 = smul.u32 32, %s22
          %p199 = scmp.lt.s32.totalorder %s21, 1
          %s200 = scalar_select %p199, %s21, 1
          %p201 = scmp.lt.s32.totalorder %s198, 31
          %s202 = scalar_select %p201, %s198, 31
          %s203 = smul.addr %s200, 32
          %s204 = sadd.s32 %s202, %s203
          %s205 = smul.addr %s204, 8
          %s206 = scalar_lea.vmem %s0, %s205
          %s207 = smul.u32 32, %s22
        $region36: #{tpu_custom_call.1} parent=31 // pred_fallthru
          _
      $region32: #{tpu_custom_call.1} parent=5 // pred_fallthru
        _
      %p208 = scmp.le.s32.totalorder 1, %s14
      %p209 = scmp.lt.s32.totalorder %s14, 3
      %p210 = pnand %p208, %p209
      %p211 = pneg %p210
      // Predicated region
      $region37: #{tpu_custom_call.1} parent=5 // pred_check
        _
      $region38: #{tpu_custom_call.1} parent=5 // pred_check_branch
        %213 = sbr.rel (%p210) target = $region40
      $region39: #{tpu_custom_call.1} parent=5 // pred_region
        %s214 = ssub.s32 %s14, 1
        %s215 = smul.u32 32, %s24
        %p216 = scmp.lt.s32.totalorder %s23, 1
        %s217 = scalar_select %p216, %s23, 1
        %p218 = scmp.lt.s32.totalorder %s215, 31
        %s219 = scalar_select %p218, %s215, 31
        %s220 = smul.addr %s217, 32
        %s221 = sadd.s32 %s219, %s220
        %s222 = smul.addr %s221, 8
        %s223 = scalar_lea.vmem %s0, %s222
        %p224 = pneg %p54
        %p225 = pneg %p51
        %p226 = pneg %p75
        %p227 = pneg %p72
        %p228 = pneg %p96
        %p229 = pneg %p93
        %p230 = pneg %p117
        %p231 = pneg %p114
        %p232 = pneg %p138
        %p233 = pneg %p135
        %p234 = pneg %p164
        %p235 = pneg %p161
        %s236 = sand.u32 %s151, 1
        %s237 = scalar_lea.sflag [#allocation4], %s236
        %s238 = sand.u32 %s151, 1
        %s239 = scalar_lea.vmem [#allocation3], %s238
        %s240 = smul.u32 32, %s24
        %p241 = scmp.lt.s32.totalorder %s23, 1
        %s242 = scalar_select %p241, %s23, 1
        %p243 = scmp.lt.s32.totalorder %s240, 31
        %s244 = scalar_select %p243, %s240, 31
        %s245 = smul.addr %s242, 32
        %s246 = sadd.s32 %s244, %s245
        %s247 = smul.addr %s246, 8
        %s248 = scalar_lea.vmem %s0, %s247
        %s249 = smul.u32 32, %s24
        %p250 = scmp.eq.s32.totalorder %s24, 0
        // Predicated region
        $region41: #{tpu_custom_call.1} parent=39 // pred_check
          %p251 = pneg %p250
        $region42: #{tpu_custom_call.1} parent=39 // pred_check_branch
          %253 = sbr.rel (%p251) target = $region44
        $region43: #{tpu_custom_call.1} parent=39 // pred_region
          %vm254 = vcmask 516096
          %255 = vst.msk [vmem:[#allocation2] sm:$0x1] %vm254, 0.0
        $region44: #{tpu_custom_call.1} parent=39 // pred_fallthru
          _
        %v256 = vld [vmem:[%s248] sm:$0xff]
        %v257 = vld [vmem:[%s248 + $0x8] sm:$0xff]
        %v258 = vld [vmem:[%s248 + $0x10] sm:$0xff]
        %v259 = vld [vmem:[%s248 + $0x18] sm:$0xff]
        %v260 = vld [vmem:[%s248 + $0x20] sm:$0xff]
        %v261 = vld [vmem:[%s248 + $0x28] sm:$0xff]
        %v262 = vld [vmem:[%s248 + $0x30] sm:$0xff]
        %v263 = vld [vmem:[%s248 + $0x38] sm:$0xff]
        %v264 = vld [vmem:[%s248 + $0x40] sm:$0xff]
        %v265 = vld [vmem:[%s248 + $0x48] sm:$0xff]
        %v266 = vld [vmem:[%s248 + $0x50] sm:$0xff]
        %v267 = vld [vmem:[%s248 + $0x58] sm:$0xff]
        %v268 = vld [vmem:[%s248 + $0x60] sm:$0xff]
        %v269 = vld [vmem:[%s248 + $0x68] sm:$0xff]
        %v270 = vld [vmem:[%s248 + $0x70] sm:$0xff]
        %v271 = vld [vmem:[%s248 + $0x78] sm:$0xff]
        %v272 = vld [vmem:[%s248 + $0x80] sm:$0xff]
        %v273 = vld [vmem:[%s248 + $0x88] sm:$0xff]
        %v274 = vld [vmem:[%s248 + $0x90] sm:$0xff]
        %v275 = vld [vmem:[%s248 + $0x98] sm:$0xff]
        %v276 = vld [vmem:[%s248 + $0xa0] sm:$0xff]
        %v277 = vld [vmem:[%s248 + $0xa8] sm:$0xff]
        %v278 = vld [vmem:[%s248 + $0xb0] sm:$0xff]
        %v279 = vld [vmem:[%s248 + $0xb8] sm:$0xff]
        %v280 = vld [vmem:[%s248 + $0xc0] sm:$0xff]
        %v281 = vld [vmem:[%s248 + $0xc8] sm:$0xff]
        %v282 = vld [vmem:[%s248 + $0xd0] sm:$0xff]
        %v283 = vld [vmem:[%s248 + $0xd8] sm:$0xff]
        %v284 = vld [vmem:[%s248 + $0xe0] sm:$0xff]
        %v285 = vld [vmem:[%s248 + $0xe8] sm:$0xff]
        %v286 = vld [vmem:[%s248 + $0xf0] sm:$0xff]
        %v287 = vld [vmem:[%s248 + $0xf8] sm:$0xff]
        %v288 = vld [vmem:[#allocation2] sm:$0x1]
        %vm289 = vcmask 523264
        %v290 = vsel %vm289, %v256, 0.0
        %v291 = vsel %vm289, %v257, 0.0
        %v292 = vadd.f32 %v290, %v291
        %v293 = vsel %vm289, %v258, 0.0
        %v294 = vadd.f32 %v292, %v293
        %v295 = vsel %vm289, %v259, 0.0
        %v296 = vadd.f32 %v294, %v295
        %v297 = vsel %vm289, %v260, 0.0
        %v298 = vadd.f32 %v296, %v297
        %v299 = vsel %vm289, %v261, 0.0
        %v300 = vadd.f32 %v298, %v299
        %v301 = vsel %vm289, %v262, 0.0
        %v302 = vadd.f32 %v300, %v301
        %v303 = vsel %vm289, %v263, 0.0
        %v304 = vadd.f32 %v302, %v303
        %v305 = vsel %vm289, %v264, 0.0
        %v306 = vadd.f32 %v304, %v305
        %v307 = vsel %vm289, %v265, 0.0
        %v308 = vadd.f32 %v306, %v307
        %v309 = vsel %vm289, %v266, 0.0
        %v310 = vadd.f32 %v308, %v309
        %v311 = vsel %vm289, %v267, 0.0
        %v312 = vadd.f32 %v310, %v311
        %v313 = vsel %vm289, %v268, 0.0
        %v314 = vadd.f32 %v312, %v313
        %v315 = vsel %vm289, %v269, 0.0
        %v316 = vadd.f32 %v314, %v315
        %v317 = vsel %vm289, %v270, 0.0
        %v318 = vadd.f32 %v316, %v317
        %v319 = vsel %vm289, %v271, 0.0
        %v320 = vadd.f32 %v318, %v319
        %v321 = vsel %vm289, %v272, 0.0
        %v322 = vadd.f32 %v320, %v321
        %v323 = vsel %vm289, %v273, 0.0
        %v324 = vadd.f32 %v322, %v323
        %v325 = vsel %vm289, %v274, 0.0
        %v326 = vadd.f32 %v324, %v325
        %v327 = vsel %vm289, %v275, 0.0
        %v328 = vadd.f32 %v326, %v327
        %v329 = vsel %vm289, %v276, 0.0
        %v330 = vadd.f32 %v328, %v329
        %v331 = vsel %vm289, %v277, 0.0
        %v332 = vadd.f32 %v330, %v331
        %v333 = vsel %vm289, %v278, 0.0
        %v334 = vadd.f32 %v332, %v333
        %v335 = vsel %vm289, %v279, 0.0
        %v336 = vadd.f32 %v334, %v335
        %v337 = vsel %vm289, %v280, 0.0
        %v338 = vadd.f32 %v336, %v337
        %v339 = vsel %vm289, %v281, 0.0
        %v340 = vadd.f32 %v338, %v339
        %v341 = vsel %vm289, %v282, 0.0
        %v342 = vadd.f32 %v340, %v341
        %v343 = vsel %vm289, %v283, 0.0
        %v344 = vadd.f32 %v342, %v343
        %v345 = vsel %vm289, %v284, 0.0
        %v346 = vadd.f32 %v344, %v345
        %v347 = vsel %vm289, %v285, 0.0
        %v348 = vadd.f32 %v346, %v347
        %v349 = vsel %vm289, %v286, 0.0
        %v350 = vadd.f32 %v348, %v349
        %v351 = vsel %vm289, %v287, 0.0
        %v352 = vadd.f32 %v350, %v351
        %v353 = vrot.slane %v352, 4
        %v354 = vadd.f32 %v352, %v353
        %v355 = vrot.slane %v354, 2
        %v356 = vadd.f32 %v354, %v355
        %v357 = vrot.slane %v356, 1
        %v358 = vadd.f32 %v356, %v357
        %v359 = vadd.f32 %v288, %v358
        %vm360 = vcmask 516096
        %361 = vst.msk [vmem:[#allocation2] sm:$0x1] %vm360, %v359
        // Predicated region
        $region45: #{tpu_custom_call.1} parent=39 // pred_check
          %p362 = pneg %p250
        $region46: #{tpu_custom_call.1} parent=39 // pred_check_branch
          %364 = sbr.rel (%p362) target = $region48
        $region47: #{tpu_custom_call.1} parent=39 // pred_region
          %v365 = vld [vmem:[#allocation2] sm:$0x1]
          %v366 = vmul.f32 %v365, 0.00390625
          %v367 = vperm.slane %v366, 0
          %v368 = vlaneseq
          %v369 = vshrl.u32 %v368, 7
          %371 = vset.pattern.permute.xlu0 %v369
          %372 = vperm.xlu0 %371, %v367
          %v373 = vpop.permute.xlu0 %372
          %v374 = vlaneseq
          %v375 = vshrl.u32 %v374, 7
          %v376 = vadd.s32 %v375, 8
          %377 = vset.pattern.permute.xlu0 %v376
          %378 = vperm.xlu0 %377, %v367
          %v379 = vpop.permute.xlu0 %378
          %v380 = vlaneseq
          %v381 = vshrl.u32 %v380, 7
          %v382 = vadd.s32 %v381, 16
          %383 = vset.pattern.permute.xlu0 %v382
          %384 = vperm.xlu0 %383, %v367
          %v385 = vpop.permute.xlu0 %384
          %v386 = vlaneseq
          %v387 = vshrl.u32 %v386, 7
          %v388 = vadd.s32 %v387, 24
          %389 = vset.pattern.permute.xlu0 %v388
          %390 = vperm.xlu0 %389, %v367
          %v391 = vpop.permute.xlu0 %390
          %v392 = vlaneseq
          %v393 = vshrl.u32 %v392, 7
          %v394 = vadd.s32 %v393, 32
          %395 = vset.pattern.permute.xlu0 %v394
          %396 = vperm.xlu0 %395, %v367
          %v397 = vpop.permute.xlu0 %396
          %v398 = vlaneseq
          %v399 = vshrl.u32 %v398, 7
          %v400 = vadd.s32 %v399, 40
          %401 = vset.pattern.permute.xlu0 %v400
          %402 = vperm.xlu0 %401, %v367
          %v403 = vpop.permute.xlu0 %402
          %v404 = vlaneseq
          %v405 = vshrl.u32 %v404, 7
          %v406 = vadd.s32 %v405, 48
          %407 = vset.pattern.permute.xlu0 %v406
          %408 = vperm.xlu0 %407, %v367
          %v409 = vpop.permute.xlu0 %408
          %v410 = vlaneseq
          %v411 = vshrl.u32 %v410, 7
          %v412 = vadd.s32 %v411, 56
          %413 = vset.pattern.permute.xlu0 %v412
          %414 = vperm.xlu0 %413, %v367
          %v415 = vpop.permute.xlu0 %414
          %v416 = vld [vmem:[%s1] sm:$0xff]
          %v417 = vld [vmem:[%s1 + $0x8] sm:$0xff]
          %v418 = vld [vmem:[%s1 + $0x10] sm:$0xff]
          %v419 = vld [vmem:[%s1 + $0x18] sm:$0xff]
          %v420 = vld [vmem:[%s1 + $0x20] sm:$0xff]
          %v421 = vld [vmem:[%s1 + $0x28] sm:$0xff]
          %v422 = vld [vmem:[%s1 + $0x30] sm:$0xff]
          %v423 = vld [vmem:[%s1 + $0x38] sm:$0xff]
          %v424 = vmul.f32 %v373, %v416
          %v425 = vmul.f32 %v379, %v417
          %v426 = vmul.f32 %v385, %v418
          %v427 = vmul.f32 %v391, %v419
          %v428 = vmul.f32 %v397, %v420
          %v429 = vmul.f32 %v403, %v421
          %v430 = vmul.f32 %v409, %v422
          %v431 = vmul.f32 %v415, %v423
          %vm432 = vcmask 31744
          %v433 = vsel %vm432, %v424, 0.0
          %v434 = vsel %vm432, %v425, 0.0
          %v435 = vadd.f32 %v433, %v434
          %v436 = vsel %vm432, %v426, 0.0
          %v437 = vadd.f32 %v435, %v436
          %v438 = vsel %vm432, %v427, 0.0
          %v439 = vadd.f32 %v437, %v438
          %v440 = vsel %vm432, %v428, 0.0
          %v441 = vadd.f32 %v439, %v440
          %v442 = vsel %vm432, %v429, 0.0
          %v443 = vadd.f32 %v441, %v442
          %v444 = vsel %vm432, %v430, 0.0
          %v445 = vadd.f32 %v443, %v444
          %v446 = vsel %vm432, %v431, 0.0
          %v447 = vadd.f32 %v445, %v446
          %v448 = vrot.slane %v447, 4
          %v449 = vadd.f32 %v447, %v448
          %v450 = vrot.slane %v449, 2
          %v451 = vadd.f32 %v449, %v450
          %v452 = vrot.slane %v451, 1
          %v453 = vadd.f32 %v451, %v452
          %v454 = vld [vmem:[%s2] sm:$0x1]
          %v455 = vadd.f32 %v453, %v454
          %v456 = vmax.f32 %v455, 0.0
          %v457 = vperm.slane %v456, 0
          %v458 = vlaneseq
          %v459 = vshrl.u32 %v458, 7
          %461 = vset.pattern.permute.xlu0 %v459
          %462 = vperm.xlu0 %461, %v457
          %v463 = vpop.permute.xlu0 %462
          %v464 = vld [vmem:[%s3] sm:$0xf]
          %v465 = vmul.f32 %v463, %v464
          %vm466 = vcmask 519168
          %v467 = vsel %vm466, %v465, 0.0
          %v468 = vrot.slane %v467, 4
          %v469 = vadd.f32 %v467, %v468
          %v470 = vrot.slane %v469, 2
          %v471 = vadd.f32 %v469, %v470
          %v472 = vrot.slane %v471, 1
          %v473 = vadd.f32 %v471, %v472
          %v474 = vld [vmem:[%s4] sm:$0x1]
          %v475 = vadd.f32 %v473, %v474
          %v476 = vxor.u32 %v475, 2147483648
          %v477 = vmul.f32 %v476, 1.442695
          %v478 = vpow.pop %v477
          %v479 = vadd.f32 %v478, 1.0
          %v480 = vrcp.pop %v479
          %v481 = vmul.f32 %v479, %v480
          %v482 = vsub.f32 1.0, %v481
          %v483 = vmul.f32 %v480, %v482
          %v484 = vadd.f32 %v480, %v483
          %vm485 = vweird.f32 %v479
          %vm486 = vweird.f32 %v480
          %vm487 = vmor %vm485, %vm486
          %v488 = vsel %vm487, %v480, %v484
          %v489 = vand.u32 2147483647, %v479
          %vm490 = vcmp.eq.f32.partialorder %v489, 8.507059e+37
          %v491 = vand.u32 %v479, 2147483648
          %v492 = vor.u32 1.1754944e-38, %v491
          %v493 = vsel %vm490, %v492, %v488
          %v494 = vmul.f32 1.0, %v493
          %495 = vst.msk [vmem:[%s239] sm:$0x1] %vm360, %v494
        $region48: #{tpu_custom_call.1} parent=39 // pred_fallthru
          _
        %s496 = sand.u32 %s151, 1
        %s497 = scalar_lea.sflag [#allocation4], %s496
        %s498 = sand.u32 %s151, 1
        %s499 = scalar_lea.vmem [#allocation3], %s498
        // Predicated region
        $region49: #{tpu_custom_call.1} parent=39 // pred_check
          %p500 = pneg %p161
        $region50: #{tpu_custom_call.1} parent=39 // pred_check_branch
          %502 = sbr.rel (%p500) target = $region52
        $region51: #{tpu_custom_call.1} parent=39 // pred_region
          %504 = vsyncadd %s497, 0
          %s505 = scalar_lea.hbm %s5, %s23
          %s507 = sshll.u32 %s499, 4
          %s508 = int_to_ptr.vmem [resolvable:$true] %s507
          %s509 = sshll.u32 %s505, 4
          %s510 = int_to_ptr.hbm [resolvable:$true] %s509
          %512 = dma.vmem_to_hbm [thread:$0]  %s508, 16, %s510, %s497
        $region52: #{tpu_custom_call.1} parent=39 // pred_fallthru
          _
      $region40: #{tpu_custom_call.1} parent=5 // pred_fallthru
        _
      %p513 = scmp.le.s32.totalorder 2, %s14
      // Predicated region
      $region53: #{tpu_custom_call.1} parent=5 // pred_check
        %p514 = pneg %p513
      $region54: #{tpu_custom_call.1} parent=5 // pred_check_branch
        %516 = sbr.rel (%p514) target = $region56
      $region55: #{tpu_custom_call.1} parent=5 // pred_region
        %s517 = ssub.s32 %s14, 2
        // Predicated region
        $region57: #{tpu_custom_call.1} parent=55 // pred_check
          %p518 = pneg %p167
        $region58: #{tpu_custom_call.1} parent=55 // pred_check_branch
          %520 = sbr.rel (%p518) target = $region60
        $region59: #{tpu_custom_call.1} parent=55 // pred_region
          %s521 = sand.u32 %s152, 1
          %s522 = scalar_lea.sflag [#allocation4], %s521
          %s523 = sand.u32 %s152, 1
          %s524 = scalar_lea.vmem [#allocation3], %s523
          %526 = dma.done %s522, 16
        $region60: #{tpu_custom_call.1} parent=55 // pred_fallthru
          _
      $region56: #{tpu_custom_call.1} parent=5 // pred_fallthru
        _
    $region6: #{tpu_custom_call.1} parent=1 // loop_footer
      %s18 = sadd.s32 1, %s14
    $region7: #{tpu_custom_call.1} parent=1 // loop_footer_branch
      %13 = sbr.rel target = $region3
    $region8: #{tpu_custom_call.1} parent=1 // loop_exit
      _
    %527 = vsyncpa [#allocation4], 1
    %s528 = scalar_lea.sflag [#allocation4], 1
    %529 = vsyncpa %s528, 1

</llo_original>
